<compile_context>
chip_gen: v7x
topology: tpu7x:2x2x1
jax: 0.10.0
libtpu: 0.0.40
codegen_flags: <defaults>
</compile_context>

<pallas_src>
import functools

import jax
import jax.numpy as jnp
from jax.experimental import pallas as pl
from jax.experimental.pallas import tpu as pltpu


# ---------------------------------------------------------------------------
# Kernels
# ---------------------------------------------------------------------------

def _layer_norm_kernel(x_ref, gamma_ref, beta_ref, o_ref, *, eps, inv_d):
    """General path: one logical row per physical row (d_model on lanes)."""
    x = x_ref[...].astype(jnp.float32)
    # Single-pass statistics: one sweep over the block yields both moments.
    s1 = jnp.sum(x, axis=-1, keepdims=True)
    s2 = jnp.sum(x * x, axis=-1, keepdims=True)
    mean = s1 * inv_d
    var = jnp.maximum(s2 * inv_d - mean * mean, 0.0)   # guard cancellation
    inv_std = jax.lax.rsqrt(var + eps)                  # EUP slot (cheap)
    scale = inv_std * gamma_ref[...]                    # gamma folded into scale
    o_ref[...] = ((x - mean) * scale + beta_ref[...]).astype(o_ref.dtype)


def _layer_norm_folded_kernel(x_ref, gamma_ref, beta_ref, seg_ref, o_ref, *,
                              eps, inv_d):
    """Lane-folded path for d_model < 128 (128 % d_model == 0).

    Each physical row packs k = 128 // d_model logical rows, so I/O is
    lane-dense.  `seg` is a (128,128) block-diagonal 0/1 matrix: x @ seg gives,
    in every lane, the sum over that lane's segment (stats already broadcast).
    """
    x = x_ref[...].astype(jnp.float32)
    seg = seg_ref[...]                                   # (128, 128) f32, 0/1

    def seg_sum(v):
        # bf16 hi/lo split keeps the MXU segment-sums ~f32 accurate even if
        # the matmul internally runs bf16 passes (seg is exactly 0/1).
        hi = v.astype(jnp.bfloat16).astype(jnp.float32)
        lo = v - hi
        return (jnp.dot(hi, seg, preferred_element_type=jnp.float32) +
                jnp.dot(lo, seg, preferred_element_type=jnp.float32))

    s1 = seg_sum(x)                                      # per-lane segment sum
    s2 = seg_sum(x * x)
    mean = s1 * inv_d
    var = jnp.maximum(s2 * inv_d - mean * mean, 0.0)
    inv_std = jax.lax.rsqrt(var + eps)
    scale = inv_std * gamma_ref[...]
    o_ref[...] = ((x - mean) * scale + beta_ref[...]).astype(o_ref.dtype)


# ---------------------------------------------------------------------------
# Wrapper helpers
# ---------------------------------------------------------------------------

def _cdiv(a, b):
    return -(-a // b)


def _round_up(x, m):
    return ((x + m - 1) // m) * m


def _row_multiple(dtype):
    itemsize = jnp.dtype(dtype).itemsize
    if itemsize >= 4:
        return 8
    if itemsize == 2:
        return 16
    return 32


def _vmem_capacity_bytes():
    try:
        cap = int(getattr(pltpu.get_tpu_info(), "vmem_capacity_bytes", 0))
        if cap > 0:
            return cap
    except Exception:
        pass
    return 64 << 20  # conservative (v7x-sized) fallback: safe on every gen


def _pick_tile_rows(phys_rows, phys_d, dtype, vmem_limit, target_block_bytes):
    """Pick a row tile sized by both the block-byte target and the VMEM budget."""
    mult = _row_multiple(dtype)
    if phys_rows <= mult:
        # Single block whose first dim equals the full array dim (legal).
        return phys_rows
    itemsize = jnp.dtype(dtype).itemsize
    io_row = phys_d * itemsize
    f32_row = phys_d * 4
    # Double-buffered in + out blocks plus ~5 live f32 block temporaries.
    per_row = 4 * io_row + 5 * f32_row
    budget_rows = max(mult, (vmem_limit - (4 << 20)) // per_row)
    target_rows = max(mult, target_block_bytes // io_row)
    tile = min(target_rows, budget_rows)
    tile = max(mult, (tile // mult) * mult)
    # Keep the last block a standard ragged block (tile <= phys_rows).
    tile = min(tile, (phys_rows // mult) * mult)
    # At least two blocks so both v7x TensorCores get work (harmless on 1-TC).
    if _cdiv(phys_rows, tile) < 2:
        tile = max(mult, _round_up(_cdiv(phys_rows, 2), mult))
    return tile


# ---------------------------------------------------------------------------
# Public entry point
# ---------------------------------------------------------------------------

def layer_norm(x, gamma, beta, eps=1e-6, tile_rows=None):
    """LayerNorm over the last dimension of x. gamma/beta have shape (d_model,)."""
    orig_shape = x.shape
    d_model = orig_shape[-1]
    rows = 1
    for s in orig_shape[:-1]:
        rows *= s
    if rows == 0 or d_model == 0:
        return x

    x2 = x.reshape(rows, d_model)
    gamma_f32 = gamma.reshape(-1).astype(jnp.float32)
    beta_f32 = beta.reshape(-1).astype(jnp.float32)

    fold = (d_model < 128) and (128 % d_model == 0)
    if fold:
        k = 128 // d_model
        rows_padded = _round_up(rows, k)
        if rows_padded != rows:
            # TODO(synk): padding to a multiple of k costs one extra copy of x;
            # a remainder kernel would avoid it when rows % k != 0.
            pad = jnp.zeros((rows_padded - rows, d_model), x2.dtype)
            x2 = jnp.concatenate([x2, pad], axis=0)
        phys_rows, phys_d = rows_padded // k, 128
        x2 = x2.reshape(phys_rows, phys_d)          # row-major: free relabel
        gamma2 = jnp.tile(gamma_f32, (k,)).reshape(1, phys_d)
        beta2 = jnp.tile(beta_f32, (k,)).reshape(1, phys_d)
        lane_seg = jnp.arange(phys_d, dtype=jnp.int32) // d_model
        seg = (lane_seg[:, None] == lane_seg[None, :]).astype(jnp.float32)
    else:
        k = 1
        phys_rows, phys_d = rows, d_model
        gamma2 = gamma_f32.reshape(1, d_model)
        beta2 = beta_f32.reshape(1, d_model)
        seg = None

    itemsize = jnp.dtype(x.dtype).itemsize
    vmem_cap = _vmem_capacity_bytes()
    # Leave headroom below physical VMEM: ~51 MiB on 64 MiB parts (v7x),
    # up to ~100 MiB on 128 MiB parts (v5e/v6e).
    vmem_limit = max(min(int(vmem_cap * 0.8), 100 << 20), 16 << 20)
    target_block_bytes = (4 << 20) if vmem_cap <= (64 << 20) else (8 << 20)

    if tile_rows is None:
        tile_rows = _pick_tile_rows(phys_rows, phys_d, x.dtype, vmem_limit,
                                    target_block_bytes)

    io_block = tile_rows * phys_d * itemsize
    f32_block = tile_rows * phys_d * 4
    needed = 4 * io_block + 5 * f32_block + (1 << 20)
    if needed > vmem_limit:
        raise ValueError(
            f"tile_rows={tile_rows} needs ~{needed >> 20} MiB VMEM, over the "
            f"{vmem_limit >> 20} MiB budget; pass a smaller tile_rows.")

    grid = (_cdiv(phys_rows, tile_rows),)
    inv_d = 1.0 / float(d_model)

    # NOTE: pipeline_mode=pl.Buffered(3) on the x/out specs is worth a sweep
    # on v7x once blocks are this large; default depth 2 kept here.
    in_specs = [
        pl.BlockSpec((tile_rows, phys_d), lambda i: (i, 0)),
        pl.BlockSpec((1, phys_d), lambda i: (0, 0)),
        pl.BlockSpec((1, phys_d), lambda i: (0, 0)),
    ]
    if fold:
        kernel = functools.partial(_layer_norm_folded_kernel, eps=eps, inv_d=inv_d)
        in_specs = in_specs + [pl.BlockSpec((phys_d, phys_d), lambda i: (0, 0))]
        operands = (x2, gamma2, beta2, seg)
    else:
        kernel = functools.partial(_layer_norm_kernel, eps=eps, inv_d=inv_d)
        operands = (x2, gamma2, beta2)

    cost = pl.CostEstimate(
        flops=8 * rows * d_model,
        transcendentals=rows,
        bytes_accessed=2 * rows * d_model * itemsize + 2 * d_model * 4,
    )

    out = pl.pallas_call(
        kernel,
        out_shape=jax.ShapeDtypeStruct((phys_rows, phys_d), x.dtype),
        grid_spec=pltpu.PrefetchScalarGridSpec(
            num_scalar_prefetch=0,
            grid=grid,
            in_specs=in_specs,
            out_specs=pl.BlockSpec((tile_rows, phys_d), lambda i: (i, 0)),
        ),
        compiler_params=pltpu.CompilerParams(
            dimension_semantics=("parallel",),
            vmem_limit_bytes=int(vmem_limit),
        ),
        cost_estimate=cost,
    )(*operands)

    if fold:
        out = out.reshape(phys_rows * k, d_model)[:rows]
    return out.reshape(orig_shape)


if __name__ == "__main__":
    key = jax.random.PRNGKey(0)
    batch, seq, d_model = 2, 8, 32
    x = jax.random.normal(key, (batch, seq, d_model), dtype=jnp.float32)

    # deterministic parameter init, matching nn.Parameter(torch.ones/zeros)
    gamma = jnp.ones((d_model,), dtype=jnp.float32)
    beta = jnp.zeros((d_model,), dtype=jnp.float32)

    out = layer_norm(x, gamma, beta, eps=1e-6)
    out = jax.block_until_ready(out)

    # reference check against plain JAX (lane-folded path, d_model=32)
    mean = jnp.mean(x, axis=-1, keepdims=True)
    var = jnp.mean((x - mean) ** 2, axis=-1, keepdims=True)
    ref = gamma * ((x - mean) / jnp.sqrt(var + 1e-6)) + beta
    assert jnp.allclose(out, ref, atol=1e-5, rtol=1e-5), "mismatch (folded path)"

    # also exercise the general (d_model >= 128) path
    d2 = 256
    x2 = jax.random.normal(jax.random.PRNGKey(1), (4, 8, d2), dtype=jnp.float32)
    g2 = jnp.ones((d2,), dtype=jnp.float32)
    b2 = jnp.zeros((d2,), dtype=jnp.float32)
    out2 = jax.block_until_ready(layer_norm(x2, g2, b2, eps=1e-6))
    m2 = jnp.mean(x2, axis=-1, keepdims=True)
    v2 = jnp.mean((x2 - m2) ** 2, axis=-1, keepdims=True)
    ref2 = g2 * ((x2 - m2) / jnp.sqrt(v2 + 1e-6)) + b2
    assert jnp.allclose(out2, ref2, atol=1e-5, rtol=1e-5), "mismatch (general path)"

    print("KERNEL_OK")
</pallas_src>

<mosaic_0001>
module attributes {stable_mosaic.version = 11 : i64} {
  func.func @_layer_norm_folded_kernel(%arg0: i32, %arg1: memref<4x128xf32, #tpu.memory_space<vmem>>, %arg2: memref<1x128xf32, #tpu.memory_space<vmem>>, %arg3: memref<1x128xf32, #tpu.memory_space<vmem>>, %arg4: memref<128x128xf32, #tpu.memory_space<vmem>>, %arg5: memref<4x128xf32, #tpu.memory_space<vmem>>) attributes {dimension_semantics = [#tpu.dimension_semantics<parallel>], iteration_bounds = array<i64: 1>, scalar_prefetch = 0 : i64, scratch_operands = 0 : i64, tpu.core_type = #tpu.core_type<tc>, window_params = [{transform_indices = @transform_0, window_bounds = array<i64: 4, 128>}, {pipeline_mode = #tpu.pipeline_mode<synchronous>, transform_indices = @transform_1, window_bounds = array<i64: 1, 128>}, {pipeline_mode = #tpu.pipeline_mode<synchronous>, transform_indices = @transform_2, window_bounds = array<i64: 1, 128>}, {pipeline_mode = #tpu.pipeline_mode<synchronous>, transform_indices = @transform_3, window_bounds = array<i64: 128, 128>}, {transform_indices = @transform_4, window_bounds = array<i64: 4, 128>}]} {
    %c0 = arith.constant 0 : index
    %c0_0 = arith.constant 0 : index
    %0 = vector.load %arg1[%c0, %c0_0] : memref<4x128xf32, #tpu.memory_space<vmem>>, vector<4x128xf32>
    %c0_1 = arith.constant 0 : index
    %c0_2 = arith.constant 0 : index
    %1 = vector.load %arg4[%c0_1, %c0_2] : memref<128x128xf32, #tpu.memory_space<vmem>>, vector<128x128xf32>
    %2 = arith.truncf %0 : vector<4x128xf32> to vector<4x128xbf16>
    %3 = arith.extf %2 : vector<4x128xbf16> to vector<4x128xf32>
    %4 = arith.subf %0, %3 : vector<4x128xf32>
    %cst = arith.constant dense<0.000000e+00> : vector<4x128xf32>
    %5 = tpu.matmul %3, %1, %cst {dimension_numbers = #tpu.dot_dimension_numbers<[1], [0], [0], [1], [0, 0, 1, 1], [], []>} : vector<4x128xf32>, vector<128x128xf32>, vector<4x128xf32> -> vector<4x128xf32>
    %cst_3 = arith.constant dense<0.000000e+00> : vector<4x128xf32>
    %6 = tpu.matmul %4, %1, %cst_3 {dimension_numbers = #tpu.dot_dimension_numbers<[1], [0], [0], [1], [0, 0, 1, 1], [], []>} : vector<4x128xf32>, vector<128x128xf32>, vector<4x128xf32> -> vector<4x128xf32>
    %7 = arith.addf %5, %6 : vector<4x128xf32>
    %8 = arith.mulf %0, %0 : vector<4x128xf32>
    %9 = arith.truncf %8 : vector<4x128xf32> to vector<4x128xbf16>
    %10 = arith.extf %9 : vector<4x128xbf16> to vector<4x128xf32>
    %11 = arith.subf %8, %10 : vector<4x128xf32>
    %cst_4 = arith.constant dense<0.000000e+00> : vector<4x128xf32>
    %12 = tpu.matmul %10, %1, %cst_4 {dimension_numbers = #tpu.dot_dimension_numbers<[1], [0], [0], [1], [0, 0, 1, 1], [], []>} : vector<4x128xf32>, vector<128x128xf32>, vector<4x128xf32> -> vector<4x128xf32>
    %cst_5 = arith.constant dense<0.000000e+00> : vector<4x128xf32>
    %13 = tpu.matmul %11, %1, %cst_5 {dimension_numbers = #tpu.dot_dimension_numbers<[1], [0], [0], [1], [0, 0, 1, 1], [], []>} : vector<4x128xf32>, vector<128x128xf32>, vector<4x128xf32> -> vector<4x128xf32>
    %14 = arith.addf %12, %13 : vector<4x128xf32>
    %cst_6 = arith.constant 3.125000e-02 : f32
    %15 = vector.broadcast %cst_6 : f32 to vector<4x128xf32>
    %16 = arith.mulf %7, %15 : vector<4x128xf32>
    %cst_7 = arith.constant 3.125000e-02 : f32
    %17 = vector.broadcast %cst_7 : f32 to vector<4x128xf32>
    %18 = arith.mulf %14, %17 : vector<4x128xf32>
    %19 = arith.mulf %16, %16 : vector<4x128xf32>
    %20 = arith.subf %18, %19 : vector<4x128xf32>
    %cst_8 = arith.constant 0.000000e+00 : f32
    %21 = vector.broadcast %cst_8 : f32 to vector<4x128xf32>
    %22 = arith.maximumf %20, %21 : vector<4x128xf32>
    %cst_9 = arith.constant 9.99999997E-7 : f32
    %23 = vector.broadcast %cst_9 : f32 to vector<4x128xf32>
    %24 = arith.addf %22, %23 : vector<4x128xf32>
    %25 = math.rsqrt %24 : vector<4x128xf32>
    %c0_10 = arith.constant 0 : index
    %c0_11 = arith.constant 0 : index
    %26 = vector.load %arg2[%c0_10, %c0_11] : memref<1x128xf32, #tpu.memory_space<vmem>>, vector<1x128xf32>
    %27 = vector.broadcast %26 : vector<1x128xf32> to vector<4x128xf32>
    %28 = arith.mulf %25, %27 : vector<4x128xf32>
    %29 = arith.subf %0, %16 : vector<4x128xf32>
    %30 = arith.mulf %29, %28 : vector<4x128xf32>
    %c0_12 = arith.constant 0 : index
    %c0_13 = arith.constant 0 : index
    %31 = vector.load %arg3[%c0_12, %c0_13] : memref<1x128xf32, #tpu.memory_space<vmem>>, vector<1x128xf32>
    %32 = vector.broadcast %31 : vector<1x128xf32> to vector<4x128xf32>
    %33 = arith.addf %30, %32 : vector<4x128xf32>
    %c0_14 = arith.constant 0 : index
    %c0_15 = arith.constant 0 : index
    %34 = vector.load %arg5[%c0_14, %c0_15] : memref<4x128xf32, #tpu.memory_space<vmem>>, vector<4x128xf32>
    tpu.vector_store %arg5[%c0_14, %c0_15], %33 {strides = array<i32>} : memref<4x128xf32, #tpu.memory_space<vmem>>, vector<4x128xf32>,
    return
  }
  func.func @transform_0(%arg0: i32) -> (i32, i32) {
    %c0_i32 = arith.constant 0 : i32
    %c0_i32_0 = arith.constant 0 : i32
    return %arg0, %c0_i32 : i32, i32
  }
  func.func @transform_1(%arg0: i32) -> (i32, i32) {
    %c0_i32 = arith.constant 0 : i32
    %c0_i32_0 = arith.constant 0 : i32
    %c0_i32_1 = arith.constant 0 : i32
    return %c0_i32, %c0_i32_0 : i32, i32
  }
  func.func @transform_2(%arg0: i32) -> (i32, i32) {
    %c0_i32 = arith.constant 0 : i32
    %c0_i32_0 = arith.constant 0 : i32
    %c0_i32_1 = arith.constant 0 : i32
    return %c0_i32, %c0_i32_0 : i32, i32
  }
  func.func @transform_3(%arg0: i32) -> (i32, i32) {
    %c0_i32 = arith.constant 0 : i32
    %c0_i32_0 = arith.constant 0 : i32
    %c0_i32_1 = arith.constant 0 : i32
    return %c0_i32, %c0_i32_0 : i32, i32
  }
  func.func @transform_4(%arg0: i32) -> (i32, i32) {
    %c0_i32 = arith.constant 0 : i32
    %c0_i32_0 = arith.constant 0 : i32
    return %arg0, %c0_i32 : i32, i32
  }
}

</mosaic_0001>

<llo_original>
// kernel: tpu_custom_call.1
$region0: #{tpu_custom_call.1}
  #allocation0 [shape = 'u32[]', space=smem, size = 0x4, offset = 0x4, fixed_abs, tag = 'smem constant byte address 0x4 - core index']
  #allocation1 [shape = 'u32[144,128]{1,0:T(1,128)}', space=vmem, size = 0x12000, scoped, tag = 'internal scratch']
  %s0 = inlined_call_operand.hbm [shape: f32[4,128], index: 0, kind: input, shape index: {}]
  %s1 = inlined_call_operand.vmem [shape: f32[1,128], index: 1, kind: input, shape index: {}]
  %s2 = inlined_call_operand.vmem [shape: f32[1,128], index: 2, kind: input, shape index: {}]
  %s3 = inlined_call_operand.hbm [shape: f32[128,128], index: 3, kind: input, shape index: {}]
  %s4 = inlined_call_operand.hbm [shape: f32[4,128], index: 4, kind: output, shape index: {}]
  %s5 = sld [smem:[#allocation0]]
  $region34: #{tpu_custom_call.1} parent=0
    _
  %s7 = ssub.s32 1, %s5
  %s8 = scalar_select 0, %s7, %s5
  $region1: #{tpu_custom_call.1} parent=0
    #allocation2 [shape = 'u8[2048]{0}', space=vmem, size = 0x800, scoped, tag = 'input window, operand 0, single buffered']
    #allocation3 [shape = 's32[1]{0}', space=sflag, size = 0x4, scoped, tag = 'scoped memory for tpu_custom_call.1']
    #allocation4 [shape = 's32[1]{0}', space=sflag, size = 0x4, scoped, tag = 'scoped memory for tpu_custom_call.1']
    #allocation5 [shape = 'u8[65536]{0}', space=vmem, size = 0x10000, scoped, tag = 'input window, operand 3, single buffered']
    #allocation6 [shape = 's32[1]{0}', space=sflag, size = 0x4, scoped, tag = 'scoped memory for tpu_custom_call.1']
    #allocation7 [shape = 'u8[2048]{0}', space=vmem, size = 0x800, scoped, tag = 'output window, operand 0, single buffered']
    %9 = vsyncpa [#allocation3], 0
    %10 = vsyncpa [#allocation6], 0
    %11 = vsyncpa [#allocation4], 0
    // Predicated region
    $region2: #{tpu_custom_call.1} parent=1 // pred_check
      _
    $region3: #{tpu_custom_call.1} parent=1 // pred_check_branch
      %13 = sbr.rel (0) target = $region5
    $region4: #{tpu_custom_call.1} parent=1 // pred_region
      %s15 = ssub.s32 64, 64
      %16 = vsyncadd [#allocation3], %s15
      %s18 = sshll.u32 [#allocation2], 4
      %s19 = int_to_ptr.vmem [resolvable:$true] %s18
      %21 = dma.hbm_to_vmem [thread:$0]  %s0, 64, %s19, [#allocation3]
    $region5: #{tpu_custom_call.1} parent=1 // pred_fallthru
      _
    // Predicated region
    $region6: #{tpu_custom_call.1} parent=1 // pred_check
      _
    $region7: #{tpu_custom_call.1} parent=1 // pred_check_branch
      %23 = sbr.rel (0) target = $region9
    $region8: #{tpu_custom_call.1} parent=1 // pred_region
      _
    $region9: #{tpu_custom_call.1} parent=1 // pred_fallthru
      _
    // Predicated region
    $region10: #{tpu_custom_call.1} parent=1 // pred_check
      _
    $region11: #{tpu_custom_call.1} parent=1 // pred_check_branch
      %25 = sbr.rel (0) target = $region13
    $region12: #{tpu_custom_call.1} parent=1 // pred_region
      _
    $region13: #{tpu_custom_call.1} parent=1 // pred_fallthru
      _
    // Predicated region
    $region14: #{tpu_custom_call.1} parent=1 // pred_check
      _
    $region15: #{tpu_custom_call.1} parent=1 // pred_check_branch
      %27 = sbr.rel (0) target = $region17
    $region16: #{tpu_custom_call.1} parent=1 // pred_region
      %s29 = ssub.s32 2048, 2048
      %30 = vsyncadd [#allocation6], %s29
      %s31 = sshll.u32 [#allocation5], 4
      %s32 = int_to_ptr.vmem [resolvable:$true] %s31
      %37 = dma.hbm_to_vmem [thread:$0]  %s3, 2048, %s32, [#allocation6], 128, 128, 8
    $region17: #{tpu_custom_call.1} parent=1 // pred_fallthru
      _
    // Predicated region
    $region18: #{tpu_custom_call.1} parent=1 // pred_check
      _
    $region19: #{tpu_custom_call.1} parent=1 // pred_check_branch
      %39 = sbr.rel (0) target = $region21
    $region20: #{tpu_custom_call.1} parent=1 // pred_region
      %40 = dma.done [#allocation3], 64
    $region21: #{tpu_custom_call.1} parent=1 // pred_fallthru
      _
    // Predicated region
    $region22: #{tpu_custom_call.1} parent=1 // pred_check
      _
    $region23: #{tpu_custom_call.1} parent=1 // pred_check_branch
      %42 = sbr.rel (0) target = $region25
    $region24: #{tpu_custom_call.1} parent=1 // pred_region
      %43 = dma.done [#allocation6], 2048
    $region25: #{tpu_custom_call.1} parent=1 // pred_fallthru
      _
    %v44 = vld [vmem:[#allocation2] sm:$0xf]
    %v45 = vld [vmem:[#allocation5] sm:$0xff]
    %v46 = vld [vmem:[#allocation5 + $0x8] sm:$0xff]
    %v47 = vld [vmem:[#allocation5 + $0x10] sm:$0xff]
    %v48 = vld [vmem:[#allocation5 + $0x18] sm:$0xff]
    %v49 = vld [vmem:[#allocation5 + $0x20] sm:$0xff]
    %v50 = vld [vmem:[#allocation5 + $0x28] sm:$0xff]
    %v51 = vld [vmem:[#allocation5 + $0x30] sm:$0xff]
    %v52 = vld [vmem:[#allocation5 + $0x38] sm:$0xff]
    %v53 = vld [vmem:[#allocation5 + $0x40] sm:$0xff]
    %v54 = vld [vmem:[#allocation5 + $0x48] sm:$0xff]
    %v55 = vld [vmem:[#allocation5 + $0x50] sm:$0xff]
    %v56 = vld [vmem:[#allocation5 + $0x58] sm:$0xff]
    %v57 = vld [vmem:[#allocation5 + $0x60] sm:$0xff]
    %v58 = vld [vmem:[#allocation5 + $0x68] sm:$0xff]
    %v59 = vld [vmem:[#allocation5 + $0x70] sm:$0xff]
    %v60 = vld [vmem:[#allocation5 + $0x78] sm:$0xff]
    %v61 = vpack.c.bf16 %v44, %v44
    %v62 = vunpack.c.l.bf16 %v61
    %v63 = vsub.f32 %v44, %v62
    %64 = vmatprep.subr.mxu0 0.0
    %65 = vmatpush1.msra.mxu0 %v45
    %66 = vmatprep.subr.mxu0 0.0
    %67 = vmatpush1.msra.mxu0 %v46
    %68 = vmatprep.subr.mxu0 0.0
    %69 = vmatpush1.msra.mxu0 %v47
    %70 = vmatprep.subr.mxu0 0.0
    %71 = vmatpush1.msra.mxu0 %v48
    %72 = vmatprep.subr.mxu0 0.0
    %73 = vmatpush1.msra.mxu0 %v49
    %74 = vmatprep.subr.mxu0 0.0
    %75 = vmatpush1.msra.mxu0 %v50
    %76 = vmatprep.subr.mxu0 0.0
    %77 = vmatpush1.msra.mxu0 %v51
    %78 = vmatprep.subr.mxu0 0.0
    %79 = vmatpush1.msra.mxu0 %v52
    %80 = vmatprep.subr.mxu0 0.0
    %81 = vmatpush1.msra.mxu0 %v53
    %82 = vmatprep.subr.mxu0 0.0
    %83 = vmatpush1.msra.mxu0 %v54
    %84 = vmatprep.subr.mxu0 0.0
    %85 = vmatpush1.msra.mxu0 %v55
    %86 = vmatprep.subr.mxu0 0.0
    %87 = vmatpush1.msra.mxu0 %v56
    %88 = vmatprep.subr.mxu0 0.0
    %89 = vmatpush1.msra.mxu0 %v57
    %90 = vmatprep.subr.mxu0 0.0
    %91 = vmatpush1.msra.mxu0 %v58
    %92 = vmatprep.subr.mxu0 0.0
    %93 = vmatpush1.msra.mxu0 %v59
    %94 = vmatprep.subr.mxu0 0.0
    %95 = vmatpush1.msra.mxu0 %v60
    %96 = vmatprep.subr.mxu0 0.0
    %97 = vmatpush1.msra.mxu0 0.0
    %98 = vmatprep.subr.mxu0 0.0
    %99 = vmatpush1.msra.mxu0 0.0
    %100 = vmatprep.subr.mxu0 0.0
    %101 = vmatpush1.msra.mxu0 0.0
    %102 = vmatprep.subr.mxu0 0.0
    %103 = vmatpush1.msra.mxu0 0.0
    %104 = vmatprep.subr.mxu0 0.0
    %105 = vmatpush1.msra.mxu0 0.0
    %106 = vmatprep.subr.mxu0 0.0
    %107 = vmatpush1.msra.mxu0 0.0
    %108 = vmatprep.subr.mxu0 0.0
    %109 = vmatpush1.msra.mxu0 0.0
    %110 = vmatprep.subr.mxu0 0.0
    %111 = vmatpush1.msra.mxu0 0.0
    %112 = vmatprep.subr.mxu0 0.0
    %113 = vmatpush1.msra.mxu0 0.0
    %114 = vmatprep.subr.mxu0 0.0
    %115 = vmatpush1.msra.mxu0 0.0
    %116 = vmatprep.subr.mxu0 0.0
    %117 = vmatpush1.msra.mxu0 0.0
    %118 = vmatprep.subr.mxu0 0.0
    %119 = vmatpush1.msra.mxu0 0.0
    %120 = vmatprep.subr.mxu0 0.0
    %121 = vmatpush1.msra.mxu0 0.0
    %122 = vmatprep.subr.mxu0 0.0
    %123 = vmatpush1.msra.mxu0 0.0
    %124 = vmatprep.subr.mxu0 0.0
    %125 = vmatpush1.msra.mxu0 0.0
    %126 = vmatprep.subr.mxu0 0.0
    %127 = vmatpush1.msra.mxu0 0.0
    %128 = vmatprep.mubr.f32.mxu0 0.0
    %129 = vmatmul.mubr.f32.gmra.mrb[0].mxu0 %v63
    %v130 = vpop.f32.mrb[0].mxu0
    %v131 = vadd.f32 0.0, %v130
    %v132 = vpop.f32.mrb[0].mxu0
    %133 = vdwg.mxu0
    %134 = vmatprep.subr.mxu0 0.0
    %135 = vmatpush1.msra.mxu0 %v45
    %136 = vmatprep.subr.mxu0 0.0
    %137 = vmatpush1.msra.mxu0 %v46
    %138 = vmatprep.subr.mxu0 0.0
    %139 = vmatpush1.msra.mxu0 %v47
    %140 = vmatprep.subr.mxu0 0.0
    %141 = vmatpush1.msra.mxu0 %v48
    %142 = vmatprep.subr.mxu0 0.0
    %143 = vmatpush1.msra.mxu0 %v49
    %144 = vmatprep.subr.mxu0 0.0
    %145 = vmatpush1.msra.mxu0 %v50
    %146 = vmatprep.subr.mxu0 0.0
    %147 = vmatpush1.msra.mxu0 %v51
    %148 = vmatprep.subr.mxu0 0.0
    %149 = vmatpush1.msra.mxu0 %v52
    %150 = vmatprep.subr.mxu0 0.0
    %151 = vmatpush1.msra.mxu0 %v53
    %152 = vmatprep.subr.mxu0 0.0
    %153 = vmatpush1.msra.mxu0 %v54
    %154 = vmatprep.subr.mxu0 0.0
    %155 = vmatpush1.msra.mxu0 %v55
    %156 = vmatprep.subr.mxu0 0.0
    %157 = vmatpush1.msra.mxu0 %v56
    %158 = vmatprep.subr.mxu0 0.0
    %159 = vmatpush1.msra.mxu0 %v57
    %160 = vmatprep.subr.mxu0 0.0
    %161 = vmatpush1.msra.mxu0 %v58
    %162 = vmatprep.subr.mxu0 0.0
    %163 = vmatpush1.msra.mxu0 %v59
    %164 = vmatprep.subr.mxu0 0.0
    %165 = vmatpush1.msra.mxu0 %v60
    %166 = vmatprep.subr.mxu0 0.0
    %167 = vmatpush1.msra.mxu0 0.0
    %168 = vmatprep.subr.mxu0 0.0
    %169 = vmatpush1.msra.mxu0 0.0
    %170 = vmatprep.subr.mxu0 0.0
    %171 = vmatpush1.msra.mxu0 0.0
    %172 = vmatprep.subr.mxu0 0.0
    %173 = vmatpush1.msra.mxu0 0.0
    %174 = vmatprep.subr.mxu0 0.0
    %175 = vmatpush1.msra.mxu0 0.0
    %176 = vmatprep.subr.mxu0 0.0
    %177 = vmatpush1.msra.mxu0 0.0
    %178 = vmatprep.subr.mxu0 0.0
    %179 = vmatpush1.msra.mxu0 0.0
    %180 = vmatprep.subr.mxu0 0.0
    %181 = vmatpush1.msra.mxu0 0.0
    %182 = vmatprep.subr.mxu0 0.0
    %183 = vmatpush1.msra.mxu0 0.0
    %184 = vmatprep.subr.mxu0 0.0
    %185 = vmatpush1.msra.mxu0 0.0
    %186 = vmatprep.subr.mxu0 0.0
    %187 = vmatpush1.msra.mxu0 0.0
    %188 = vmatprep.subr.mxu0 0.0
    %189 = vmatpush1.msra.mxu0 0.0
    %190 = vmatprep.subr.mxu0 0.0
    %191 = vmatpush1.msra.mxu0 0.0
    %192 = vmatprep.subr.mxu0 0.0
    %193 = vmatpush1.msra.mxu0 0.0
    %194 = vmatprep.subr.mxu0 0.0
    %195 = vmatpush1.msra.mxu0 0.0
    %196 = vmatprep.subr.mxu0 0.0
    %197 = vmatpush1.msra.mxu0 0.0
    %198 = vmatprep.mubr.f32.mxu0 0.0
    %199 = vmatmul.mubr.f32.gmra.mrb[0].mxu0 %v62
    %v200 = vpop.f32.mrb[0].mxu0
    %v201 = vadd.f32 %v131, %v200
    %v202 = vpop.f32.mrb[0].mxu0
    %203 = vdwg.mxu0
    %v204 = vmul.f32 %v44, %v44
    %v205 = vpack.c.bf16 %v204, %v204
    %v206 = vunpack.c.l.bf16 %v205
    %v207 = vsub.f32 %v204, %v206
    %208 = vmatprep.subr.mxu0 0.0
    %209 = vmatpush1.msra.mxu0 %v45
    %210 = vmatprep.subr.mxu0 0.0
    %211 = vmatpush1.msra.mxu0 %v46
    %212 = vmatprep.subr.mxu0 0.0
    %213 = vmatpush1.msra.mxu0 %v47
    %214 = vmatprep.subr.mxu0 0.0
    %215 = vmatpush1.msra.mxu0 %v48
    %216 = vmatprep.subr.mxu0 0.0
    %217 = vmatpush1.msra.mxu0 %v49
    %218 = vmatprep.subr.mxu0 0.0
    %219 = vmatpush1.msra.mxu0 %v50
    %220 = vmatprep.subr.mxu0 0.0
    %221 = vmatpush1.msra.mxu0 %v51
    %222 = vmatprep.subr.mxu0 0.0
    %223 = vmatpush1.msra.mxu0 %v52
    %224 = vmatprep.subr.mxu0 0.0
    %225 = vmatpush1.msra.mxu0 %v53
    %226 = vmatprep.subr.mxu0 0.0
    %227 = vmatpush1.msra.mxu0 %v54
    %228 = vmatprep.subr.mxu0 0.0
    %229 = vmatpush1.msra.mxu0 %v55
    %230 = vmatprep.subr.mxu0 0.0
    %231 = vmatpush1.msra.mxu0 %v56
    %232 = vmatprep.subr.mxu0 0.0
    %233 = vmatpush1.msra.mxu0 %v57
    %234 = vmatprep.subr.mxu0 0.0
    %235 = vmatpush1.msra.mxu0 %v58
    %236 = vmatprep.subr.mxu0 0.0
    %237 = vmatpush1.msra.mxu0 %v59
    %238 = vmatprep.subr.mxu0 0.0
    %239 = vmatpush1.msra.mxu0 %v60
    %240 = vmatprep.subr.mxu0 0.0
    %241 = vmatpush1.msra.mxu0 0.0
    %242 = vmatprep.subr.mxu0 0.0
    %243 = vmatpush1.msra.mxu0 0.0
    %244 = vmatprep.subr.mxu0 0.0
    %245 = vmatpush1.msra.mxu0 0.0
    %246 = vmatprep.subr.mxu0 0.0
    %247 = vmatpush1.msra.mxu0 0.0
    %248 = vmatprep.subr.mxu0 0.0
    %249 = vmatpush1.msra.mxu0 0.0
    %250 = vmatprep.subr.mxu0 0.0
    %251 = vmatpush1.msra.mxu0 0.0
    %252 = vmatprep.subr.mxu0 0.0
    %253 = vmatpush1.msra.mxu0 0.0
    %254 = vmatprep.subr.mxu0 0.0
    %255 = vmatpush1.msra.mxu0 0.0
    %256 = vmatprep.subr.mxu0 0.0
    %257 = vmatpush1.msra.mxu0 0.0
    %258 = vmatprep.subr.mxu0 0.0
    %259 = vmatpush1.msra.mxu0 0.0
    %260 = vmatprep.subr.mxu0 0.0
    %261 = vmatpush1.msra.mxu0 0.0
    %262 = vmatprep.subr.mxu0 0.0
    %263 = vmatpush1.msra.mxu0 0.0
    %264 = vmatprep.subr.mxu0 0.0
    %265 = vmatpush1.msra.mxu0 0.0
    %266 = vmatprep.subr.mxu0 0.0
    %267 = vmatpush1.msra.mxu0 0.0
    %268 = vmatprep.subr.mxu0 0.0
    %269 = vmatpush1.msra.mxu0 0.0
    %270 = vmatprep.subr.mxu0 0.0
    %271 = vmatpush1.msra.mxu0 0.0
    %272 = vmatprep.mubr.f32.mxu0 0.0
    %273 = vmatmul.mubr.f32.gmra.mrb[0].mxu0 %v207
    %v274 = vpop.f32.mrb[0].mxu0
    %v275 = vadd.f32 0.0, %v274
    %v276 = vpop.f32.mrb[0].mxu0
    %277 = vdwg.mxu0
    %278 = vmatprep.subr.mxu0 0.0
    %279 = vmatpush1.msra.mxu0 %v45
    %280 = vmatprep.subr.mxu0 0.0
    %281 = vmatpush1.msra.mxu0 %v46
    %282 = vmatprep.subr.mxu0 0.0
    %283 = vmatpush1.msra.mxu0 %v47
    %284 = vmatprep.subr.mxu0 0.0
    %285 = vmatpush1.msra.mxu0 %v48
    %286 = vmatprep.subr.mxu0 0.0
    %287 = vmatpush1.msra.mxu0 %v49
    %288 = vmatprep.subr.mxu0 0.0
    %289 = vmatpush1.msra.mxu0 %v50
    %290 = vmatprep.subr.mxu0 0.0
    %291 = vmatpush1.msra.mxu0 %v51
    %292 = vmatprep.subr.mxu0 0.0
    %293 = vmatpush1.msra.mxu0 %v52
    %294 = vmatprep.subr.mxu0 0.0
    %295 = vmatpush1.msra.mxu0 %v53
    %296 = vmatprep.subr.mxu0 0.0
    %297 = vmatpush1.msra.mxu0 %v54
    %298 = vmatprep.subr.mxu0 0.0
    %299 = vmatpush1.msra.mxu0 %v55
    %300 = vmatprep.subr.mxu0 0.0
    %301 = vmatpush1.msra.mxu0 %v56
    %302 = vmatprep.subr.mxu0 0.0
    %303 = vmatpush1.msra.mxu0 %v57
    %304 = vmatprep.subr.mxu0 0.0
    %305 = vmatpush1.msra.mxu0 %v58
    %306 = vmatprep.subr.mxu0 0.0
    %307 = vmatpush1.msra.mxu0 %v59
    %308 = vmatprep.subr.mxu0 0.0
    %309 = vmatpush1.msra.mxu0 %v60
    %310 = vmatprep.subr.mxu0 0.0
    %311 = vmatpush1.msra.mxu0 0.0
    %312 = vmatprep.subr.mxu0 0.0
    %313 = vmatpush1.msra.mxu0 0.0
    %314 = vmatprep.subr.mxu0 0.0
    %315 = vmatpush1.msra.mxu0 0.0
    %316 = vmatprep.subr.mxu0 0.0
    %317 = vmatpush1.msra.mxu0 0.0
    %318 = vmatprep.subr.mxu0 0.0
    %319 = vmatpush1.msra.mxu0 0.0
    %320 = vmatprep.subr.mxu0 0.0
    %321 = vmatpush1.msra.mxu0 0.0
    %322 = vmatprep.subr.mxu0 0.0
    %323 = vmatpush1.msra.mxu0 0.0
    %324 = vmatprep.subr.mxu0 0.0
    %325 = vmatpush1.msra.mxu0 0.0
    %326 = vmatprep.subr.mxu0 0.0
    %327 = vmatpush1.msra.mxu0 0.0
    %328 = vmatprep.subr.mxu0 0.0
    %329 = vmatpush1.msra.mxu0 0.0
    %330 = vmatprep.subr.mxu0 0.0
    %331 = vmatpush1.msra.mxu0 0.0
    %332 = vmatprep.subr.mxu0 0.0
    %333 = vmatpush1.msra.mxu0 0.0
    %334 = vmatprep.subr.mxu0 0.0
    %335 = vmatpush1.msra.mxu0 0.0
    %336 = vmatprep.subr.mxu0 0.0
    %337 = vmatpush1.msra.mxu0 0.0
    %338 = vmatprep.subr.mxu0 0.0
    %339 = vmatpush1.msra.mxu0 0.0
    %340 = vmatprep.subr.mxu0 0.0
    %341 = vmatpush1.msra.mxu0 0.0
    %342 = vmatprep.mubr.f32.mxu0 0.0
    %343 = vmatmul.mubr.f32.gmra.mrb[0].mxu0 %v206
    %v344 = vpop.f32.mrb[0].mxu0
    %v345 = vadd.f32 %v275, %v344
    %v346 = vpop.f32.mrb[0].mxu0
    %347 = vdwg.mxu0
    %v348 = vmul.f32 %v201, 0.03125
    %v349 = vmul.f32 %v345, 0.03125
    %v350 = vmul.f32 %v348, %v348
    %v351 = vsub.f32 %v349, %v350
    %v352 = vmax.f32 %v351, 0.0
    %v353 = vadd.f32 %v352, 1e-06
    %v354 = vrsqrt.pop %v353
    %v355 = vld [vmem:[%s1] sm:$0x1]
    %v357 = vlaneseq
    %v358 = vshrl.u32 %v357, 7
    %v359 = vsub.s32 0, %v358
    %v360 = vrot.slane %v355, %v359
    %v362 = vmul.f32 %v354, %v360
    %v363 = vsub.f32 %v44, %v348
    %v364 = vmul.f32 %v363, %v362
    %v365 = vld [vmem:[%s2] sm:$0x1]
    %v367 = vlaneseq
    %v368 = vshrl.u32 %v367, 7
    %v369 = vsub.s32 0, %v368
    %v370 = vrot.slane %v365, %v369
    %v372 = vadd.f32 %v364, %v370
    %373 = vst [vmem:[#allocation7] sm:$0xf] %v372
    // Predicated region
    $region26: #{tpu_custom_call.1} parent=1 // pred_check
      _
    $region27: #{tpu_custom_call.1} parent=1 // pred_check_branch
      %375 = sbr.rel (0) target = $region29
    $region28: #{tpu_custom_call.1} parent=1 // pred_region
      %s377 = ssub.s32 64, 64
      %378 = vsyncadd [#allocation4], %s377
      %s380 = sshll.u32 [#allocation7], 4
      %s381 = int_to_ptr.vmem [resolvable:$true] %s380
      %383 = dma.vmem_to_hbm [thread:$0]  %s381, 64, %s4, [#allocation4]
    $region29: #{tpu_custom_call.1} parent=1 // pred_fallthru
      _
    // Predicated region
    $region30: #{tpu_custom_call.1} parent=1 // pred_check
      _
    $region31: #{tpu_custom_call.1} parent=1 // pred_check_branch
      %385 = sbr.rel (0) target = $region33
    $region32: #{tpu_custom_call.1} parent=1 // pred_region
      %386 = dma.done [#allocation4], 64
    $region33: #{tpu_custom_call.1} parent=1 // pred_fallthru
      _
    %387 = vsyncpa [#allocation3], 1
    %388 = vsyncpa [#allocation6], 1
    %389 = vsyncpa [#allocation4], 1

</llo_original>
